<compile_context>
chip_gen: v6e
topology: v6e:2x2x1
jax: 0.10.0
libtpu: 0.0.40
codegen_flags: <defaults>
</compile_context>

<pallas_src>
import jax
import jax.numpy as jnp
from jax.experimental import pallas as pl
from jax.experimental.pallas import tpu as pltpu


def _shuffle_plug_kernel(x_ref, w1t_ref, bdw2_ref, alpha_ref, beta_ref, o_ref):
    """Whole-problem, no-grid kernel.

    x_ref    : (R, W)  rows = flattened (n, c, h) in natural NCHW order, R = N*C*H
    w1t_ref  : (W, W)  conv1 weight pre-transposed (in, out)
    bdw2_ref : (R, R)  kron(I_{N*C}, conv2 weight): block-diagonal contraction over H
    alpha_ref: (R, 1)  folded BN1*BN2 scale per row (depends only on channel c)
    beta_ref : (R, 1)  folded shift per row (depends on channel c and output row h'')
    o_ref    : (R, W)
    """
    x = x_ref[...]                                                         # (R, W)
    t1 = jnp.dot(x, w1t_ref[...], preferred_element_type=jnp.float32)      # conv1: contract W
    y = jnp.dot(bdw2_ref[...], t1, preferred_element_type=jnp.float32)     # conv2: contract H per (n,c)
    # Folded BN1/BN2 + residual + ReLU epilogue: one FMA, one add, one max.
    o_ref[...] = jnp.maximum(alpha_ref[...] * y + beta_ref[...] + x, 0.0)


def fold_shuffle_plug_params(conv1_w, conv2_w,
                             bn1_gamma, bn1_beta, bn1_mean, bn1_var,
                             bn2_gamma, bn2_beta, bn2_mean, bn2_var,
                             *, N, C, H, eps=1e-5):
    """Parameter-only preparation. Run ONCE at model load, not per forward call."""
    # TODO(synk): training-mode BatchNorm (batch statistics) not implemented; eval-mode fold only.
    s1 = bn1_gamma / jnp.sqrt(bn1_var + eps)          # (C,)
    sh1 = bn1_beta - bn1_mean * s1                    # (C,)
    s2 = bn2_gamma / jnp.sqrt(bn2_var + eps)          # (C,)
    sh2 = bn2_beta - bn2_mean * s2                    # (C,)

    # out = relu( s1*s2 * (W2 @ X @ W1^T) + (s2*sh1*rowsum(W2)[h''] + sh2) + X )
    alpha_c = s1 * s2                                              # (C,)
    rw2 = jnp.sum(conv2_w, axis=1)                                 # (H,)
    beta_ch = (s2 * sh1)[:, None] * rw2[None, :] + sh2[:, None]    # (C, H)

    R = N * C * H
    alpha_rows = jnp.broadcast_to(alpha_c[None, :, None], (N, C, H)).reshape(R, 1)
    beta_rows = jnp.broadcast_to(beta_ch[None, :, :], (N, C, H)).reshape(R, 1)

    w1t = conv1_w.T                                                    # (W_in, W_out)
    bd_w2 = jnp.kron(jnp.eye(N * C, dtype=conv2_w.dtype), conv2_w)     # (R, R) block-diagonal
    return w1t, bd_w2, alpha_rows, beta_rows


def shuffle_plug_forward(x, w1t, bd_w2, alpha_rows, beta_rows):
    """x: (N, C, H, W) float32. Folded params from fold_shuffle_plug_params."""
    N, C, H, W = x.shape
    R = N * C * H
    assert w1t.shape == (W, W), "conv1 must preserve W (residual add)"
    assert bd_w2.shape == (R, R), "block-diagonal conv2 must match N*C*H"

    x2d = x.reshape(R, W)          # bitcast reshape of the NCHW buffer — no data movement

    out2d = pl.pallas_call(
        _shuffle_plug_kernel,
        out_shape=jax.ShapeDtypeStruct((R, W), jnp.float32),
        in_specs=[pl.BlockSpec(memory_space=pltpu.MemorySpace.VMEM)] * 5,
        out_specs=pl.BlockSpec(memory_space=pltpu.MemorySpace.VMEM),
    )(x2d, w1t, bd_w2, alpha_rows, beta_rows)

    return out2d.reshape(N, C, H, W)   # bitcast reshape back — no data movement


def _reference(x, conv1_w, conv2_w,
               bn1_gamma, bn1_beta, bn1_mean, bn1_var,
               bn2_gamma, bn2_beta, bn2_mean, bn2_var, eps=1e-5):
    """Pure-JAX reference of shuffle_plug.forward (eval-mode BN, relu1=False, relu2=True)."""
    t1 = jnp.einsum("vw,nchw->nchv", conv1_w, x)                  # conv1 over W
    s1 = bn1_gamma / jnp.sqrt(bn1_var + eps)
    sh1 = bn1_beta - bn1_mean * s1
    b1 = t1 * s1[None, :, None, None] + sh1[None, :, None, None]
    t2 = jnp.einsum("uh,nchv->ncuv", conv2_w, b1)                 # conv2 over H
    s2 = bn2_gamma / jnp.sqrt(bn2_var + eps)
    sh2 = bn2_beta - bn2_mean * s2
    b2 = t2 * s2[None, :, None, None] + sh2[None, :, None, None]
    return jnp.maximum(b2 + x, 0.0)


if __name__ == "__main__":
    N, C, H, W = 2, 4, 16, 16          # small shapes: in_ch1=out_ch1=W, in_ch2=out_ch2=H, bn_ch=C
    key = jax.random.PRNGKey(0)
    ks = jax.random.split(key, 11)

    x = jax.random.normal(ks[0], (N, C, H, W), dtype=jnp.float32)
    conv1_w = jax.random.normal(ks[1], (W, W), dtype=jnp.float32) * 0.1   # bias=False
    conv2_w = jax.random.normal(ks[2], (H, H), dtype=jnp.float32) * 0.1   # bias=False

    bn1_gamma = 1.0 + 0.1 * jax.random.normal(ks[3], (C,), dtype=jnp.float32)
    bn1_beta = 0.1 * jax.random.normal(ks[4], (C,), dtype=jnp.float32)
    bn1_mean = 0.1 * jax.random.normal(ks[5], (C,), dtype=jnp.float32)
    bn1_var = 1.0 + 0.1 * jax.random.uniform(ks[6], (C,), dtype=jnp.float32)

    bn2_gamma = 1.0 + 0.1 * jax.random.normal(ks[7], (C,), dtype=jnp.float32)
    bn2_beta = 0.1 * jax.random.normal(ks[8], (C,), dtype=jnp.float32)
    bn2_mean = 0.1 * jax.random.normal(ks[9], (C,), dtype=jnp.float32)
    bn2_var = 1.0 + 0.1 * jax.random.uniform(ks[10], (C,), dtype=jnp.float32)

    # Model-load-time fold (done once; NOT part of the per-call forward).
    folded = fold_shuffle_plug_params(
        conv1_w, conv2_w,
        bn1_gamma, bn1_beta, bn1_mean, bn1_var,
        bn2_gamma, bn2_beta, bn2_mean, bn2_var,
        N=N, C=C, H=H)
    folded = jax.tree_util.tree_map(jax.block_until_ready, folded)

    fwd = jax.jit(shuffle_plug_forward)
    out = jax.block_until_ready(fwd(x, *folded))

    ref = _reference(x, conv1_w, conv2_w,
                     bn1_gamma, bn1_beta, bn1_mean, bn1_var,
                     bn2_gamma, bn2_beta, bn2_mean, bn2_var)

    assert out.shape == (N, C, H, W)
    assert jnp.allclose(out, ref, atol=1e-4, rtol=1e-4), "mismatch vs reference"

    print("KERNEL_OK")
</pallas_src>

<mosaic_0001>
module attributes {stable_mosaic.version = 11 : i64} {
  func.func @_shuffle_plug_kernel(%arg0: memref<128x16xf32, #tpu.memory_space<vmem>>, %arg1: memref<16x16xf32, #tpu.memory_space<vmem>>, %arg2: memref<128x128xf32, #tpu.memory_space<vmem>>, %arg3: memref<128x1xf32, #tpu.memory_space<vmem>>, %arg4: memref<128x1xf32, #tpu.memory_space<vmem>>, %arg5: memref<128x16xf32, #tpu.memory_space<vmem>>) attributes {dimension_semantics = [], scalar_prefetch = 0 : i64, scratch_operands = 0 : i64, tpu.core_type = #tpu.core_type<tc>} {
    %c0 = arith.constant 0 : index
    %c0_0 = arith.constant 0 : index
    %0 = vector.load %arg0[%c0, %c0_0] : memref<128x16xf32, #tpu.memory_space<vmem>>, vector<128x16xf32>
    %c0_1 = arith.constant 0 : index
    %c0_2 = arith.constant 0 : index
    %1 = vector.load %arg1[%c0_1, %c0_2] : memref<16x16xf32, #tpu.memory_space<vmem>>, vector<16x16xf32>
    %cst = arith.constant dense<0.000000e+00> : vector<128x16xf32>
    %2 = tpu.matmul %0, %1, %cst {dimension_numbers = #tpu.dot_dimension_numbers<[1], [0], [0], [1], [0, 0, 1, 1], [], []>} : vector<128x16xf32>, vector<16x16xf32>, vector<128x16xf32> -> vector<128x16xf32>
    %c0_3 = arith.constant 0 : index
    %c0_4 = arith.constant 0 : index
    %3 = vector.load %arg2[%c0_3, %c0_4] : memref<128x128xf32, #tpu.memory_space<vmem>>, vector<128x128xf32>
    %cst_5 = arith.constant dense<0.000000e+00> : vector<128x16xf32>
    %4 = tpu.matmul %3, %2, %cst_5 {dimension_numbers = #tpu.dot_dimension_numbers<[1], [0], [0], [1], [0, 0, 1, 1], [], []>} : vector<128x128xf32>, vector<128x16xf32>, vector<128x16xf32> -> vector<128x16xf32>
    %c0_6 = arith.constant 0 : index
    %c0_7 = arith.constant 0 : index
    %5 = vector.load %arg3[%c0_6, %c0_7] : memref<128x1xf32, #tpu.memory_space<vmem>>, vector<128x1xf32>
    %6 = vector.broadcast %5 : vector<128x1xf32> to vector<128x16xf32>
    %7 = arith.mulf %6, %4 : vector<128x16xf32>
    %c0_8 = arith.constant 0 : index
    %c0_9 = arith.constant 0 : index
    %8 = vector.load %arg4[%c0_8, %c0_9] : memref<128x1xf32, #tpu.memory_space<vmem>>, vector<128x1xf32>
    %9 = vector.broadcast %8 : vector<128x1xf32> to vector<128x16xf32>
    %10 = arith.addf %7, %9 : vector<128x16xf32>
    %11 = arith.addf %10, %0 : vector<128x16xf32>
    %cst_10 = arith.constant 0.000000e+00 : f32
    %12 = vector.broadcast %cst_10 : f32 to vector<128x16xf32>
    %13 = arith.maximumf %11, %12 : vector<128x16xf32>
    %c0_11 = arith.constant 0 : index
    %c0_12 = arith.constant 0 : index
    %14 = vector.load %arg5[%c0_11, %c0_12] : memref<128x16xf32, #tpu.memory_space<vmem>>, vector<128x16xf32>
    tpu.vector_store %arg5[%c0_11, %c0_12], %13 {strides = array<i32>} : memref<128x16xf32, #tpu.memory_space<vmem>>, vector<128x16xf32>,
    return
  }
}

</mosaic_0001>

<llo_original>
// kernel: shuffle_plug_forward.1
$region0: #{shuffle_plug_forward.1}
  #allocation0 [shape = 'u32[]', space=smem, size = 0x4, offset = 0x4, fixed_abs, tag = 'smem constant byte address 0x4 - core index']
  #allocation1 [shape = 'u32[144,128]{1,0:T(1,128)}', space=vmem, size = 0x12000, scoped, tag = 'internal scratch']
  %s0 = inlined_call_operand.vmem [shape: f32[128,16], index: 0, kind: input, shape index: {}]
  %s1 = inlined_call_operand.hbm [shape: f32[16,16], index: 1, kind: input, shape index: {}]
  %s2 = inlined_call_operand.vmem [shape: f32[128,128], index: 2, kind: input, shape index: {}]
  %s3 = inlined_call_operand.vmem [shape: f32[128,1], index: 3, kind: input, shape index: {}]
  %s4 = inlined_call_operand.vmem [shape: f32[128,1], index: 4, kind: input, shape index: {}]
  %s5 = inlined_call_operand.hbm [shape: f32[128,16], index: 5, kind: output, shape index: {}]
  %s6 = sld [smem:[#allocation0]]
  $region34: #{shuffle_plug_forward.1} parent=0
    _
  %s8 = ssub.s32 1, %s6
  %s9 = scalar_select 0, %s8, %s6
  $region1: #{shuffle_plug_forward.1} parent=0
    #allocation2 [shape = 'u8[8192]{0}', space=vmem, size = 0x2000, scoped, tag = 'input window, operand 1, single buffered']
    #allocation3 [shape = 's32[1]{0}', space=sflag, size = 0x4, scoped, tag = 'scoped memory for shuffle_plug_forward.1']
    #allocation4 [shape = 's32[1]{0}', space=sflag, size = 0x4, scoped, tag = 'scoped memory for shuffle_plug_forward.1']
    #allocation5 [shape = 'u8[65536]{0}', space=vmem, size = 0x10000, scoped, tag = 'output window, operand 0, single buffered']
    %10 = vsyncpa [#allocation3], 0
    %11 = vsyncpa [#allocation4], 0
    // Predicated region
    $region2: #{shuffle_plug_forward.1} parent=1 // pred_check
      _
    $region3: #{shuffle_plug_forward.1} parent=1 // pred_check_branch
      %13 = sbr.rel (0) target = $region5
    $region4: #{shuffle_plug_forward.1} parent=1 // pred_region
      _
    $region5: #{shuffle_plug_forward.1} parent=1 // pred_fallthru
      _
    // Predicated region
    $region6: #{shuffle_plug_forward.1} parent=1 // pred_check
      _
    $region7: #{shuffle_plug_forward.1} parent=1 // pred_check_branch
      %15 = sbr.rel (0) target = $region9
    $region8: #{shuffle_plug_forward.1} parent=1 // pred_region
      %s17 = ssub.s32 256, 256
      %18 = vsyncadd [#allocation3], %s17
      %s19 = sshll.u32 [#allocation2], 4
      %s20 = int_to_ptr.vmem [resolvable:$true] %s19
      %25 = dma.hbm_to_vmem [thread:$0]  %s1, 256, %s20, [#allocation3], 128, 128, 8
    $region9: #{shuffle_plug_forward.1} parent=1 // pred_fallthru
      _
    // Predicated region
    $region10: #{shuffle_plug_forward.1} parent=1 // pred_check
      _
    $region11: #{shuffle_plug_forward.1} parent=1 // pred_check_branch
      %27 = sbr.rel (0) target = $region13
    $region12: #{shuffle_plug_forward.1} parent=1 // pred_region
      _
    $region13: #{shuffle_plug_forward.1} parent=1 // pred_fallthru
      _
    // Predicated region
    $region14: #{shuffle_plug_forward.1} parent=1 // pred_check
      _
    $region15: #{shuffle_plug_forward.1} parent=1 // pred_check_branch
      %29 = sbr.rel (0) target = $region17
    $region16: #{shuffle_plug_forward.1} parent=1 // pred_region
      _
    $region17: #{shuffle_plug_forward.1} parent=1 // pred_fallthru
      _
    // Predicated region
    $region18: #{shuffle_plug_forward.1} parent=1 // pred_check
      _
    $region19: #{shuffle_plug_forward.1} parent=1 // pred_check_branch
      %31 = sbr.rel (0) target = $region21
    $region20: #{shuffle_plug_forward.1} parent=1 // pred_region
      _
    $region21: #{shuffle_plug_forward.1} parent=1 // pred_fallthru
      _
    // Predicated region
    $region22: #{shuffle_plug_forward.1} parent=1 // pred_check
      _
    $region23: #{shuffle_plug_forward.1} parent=1 // pred_check_branch
      %33 = sbr.rel (0) target = $region25
    $region24: #{shuffle_plug_forward.1} parent=1 // pred_region
      %34 = dma.done [#allocation3], 256
    $region25: #{shuffle_plug_forward.1} parent=1 // pred_fallthru
      _
    %v35 = vld [vmem:[%s0] sm:$0xff]
    %v36 = vld [vmem:[%s0 + $0x8] sm:$0xff]
    %v37 = vld [vmem:[%s0 + $0x10] sm:$0xff]
    %v38 = vld [vmem:[%s0 + $0x18] sm:$0xff]
    %v39 = vld [vmem:[%s0 + $0x20] sm:$0xff]
    %v40 = vld [vmem:[%s0 + $0x28] sm:$0xff]
    %v41 = vld [vmem:[%s0 + $0x30] sm:$0xff]
    %v42 = vld [vmem:[%s0 + $0x38] sm:$0xff]
    %v43 = vld [vmem:[%s0 + $0x40] sm:$0xff]
    %v44 = vld [vmem:[%s0 + $0x48] sm:$0xff]
    %v45 = vld [vmem:[%s0 + $0x50] sm:$0xff]
    %v46 = vld [vmem:[%s0 + $0x58] sm:$0xff]
    %v47 = vld [vmem:[%s0 + $0x60] sm:$0xff]
    %v48 = vld [vmem:[%s0 + $0x68] sm:$0xff]
    %v49 = vld [vmem:[%s0 + $0x70] sm:$0xff]
    %v50 = vld [vmem:[%s0 + $0x78] sm:$0xff]
    %v51 = vld [vmem:[#allocation2] sm:$0xff]
    %v52 = vld [vmem:[#allocation2 + $0x8] sm:$0xff]
    %vm53 = vcmask 130048
    %v55 = vsel %vm53, %v35, 0
    %v58 = vsel %vm53, %v36, 0
    %v61 = vsel %vm53, %v37, 0
    %v64 = vsel %vm53, %v38, 0
    %v67 = vsel %vm53, %v39, 0
    %v70 = vsel %vm53, %v40, 0
    %v73 = vsel %vm53, %v41, 0
    %v76 = vsel %vm53, %v42, 0
    %v79 = vsel %vm53, %v43, 0
    %v82 = vsel %vm53, %v44, 0
    %v85 = vsel %vm53, %v45, 0
    %v88 = vsel %vm53, %v46, 0
    %v91 = vsel %vm53, %v47, 0
    %v94 = vsel %vm53, %v48, 0
    %v97 = vsel %vm53, %v49, 0
    %v100 = vsel %vm53, %v50, 0
    %102 = vmatprep.subr.mxu0 0.0
    %103 = vmatpush1.msra.mxu0 0.0
    %104 = vmatprep.subr.mxu0 0.0
    %105 = vmatpush1.msra.mxu0 0.0
    %106 = vmatprep.subr.mxu0 0.0
    %107 = vmatpush1.msra.mxu0 0.0
    %108 = vmatprep.subr.mxu0 0.0
    %109 = vmatpush1.msra.mxu0 0.0
    %110 = vmatprep.subr.mxu0 0.0
    %111 = vmatpush1.msra.mxu0 0.0
    %112 = vmatprep.subr.mxu0 0.0
    %113 = vmatpush1.msra.mxu0 0.0
    %114 = vmatprep.subr.mxu0 0.0
    %115 = vmatpush1.msra.mxu0 0.0
    %116 = vmatprep.subr.mxu0 0.0
    %117 = vmatpush1.msra.mxu0 0.0
    %118 = vmatprep.subr.mxu0 0.0
    %119 = vmatpush1.msra.mxu0 0.0
    %120 = vmatprep.subr.mxu0 0.0
    %121 = vmatpush1.msra.mxu0 0.0
    %122 = vmatprep.subr.mxu0 0.0
    %123 = vmatpush1.msra.mxu0 0.0
    %124 = vmatprep.subr.mxu0 0.0
    %125 = vmatpush1.msra.mxu0 0.0
    %126 = vmatprep.subr.mxu0 0.0
    %127 = vmatpush1.msra.mxu0 0.0
    %128 = vmatprep.subr.mxu0 0.0
    %129 = vmatpush1.msra.mxu0 0.0
    %130 = vmatprep.subr.mxu0 0.0
    %131 = vmatpush1.msra.mxu0 %v52
    %132 = vmatprep.subr.mxu0 0.0
    %133 = vmatpush1.msra.mxu0 %v51
    %134 = vmatprep.subr.mxu0 0.0
    %135 = vmatpush2.msra.mxu0 0.0
    %136 = vmatprep.subr.mxu0 0.0
    %137 = vmatpush2.msra.mxu0 0.0
    %138 = vmatprep.subr.mxu0 0.0
    %139 = vmatpush2.msra.mxu0 0.0
    %140 = vmatprep.subr.mxu0 0.0
    %141 = vmatpush2.msra.mxu0 0.0
    %142 = vmatprep.subr.mxu0 0.0
    %143 = vmatpush2.msra.mxu0 0.0
    %144 = vmatprep.subr.mxu0 0.0
    %145 = vmatpush2.msra.mxu0 0.0
    %146 = vmatprep.subr.mxu0 0.0
    %147 = vmatpush2.msra.mxu0 0.0
    %148 = vmatprep.subr.mxu0 0.0
    %149 = vmatpush2.msra.mxu0 0.0
    %150 = vmatprep.subr.mxu0 0.0
    %151 = vmatpush2.msra.mxu0 0.0
    %152 = vmatprep.subr.mxu0 0.0
    %153 = vmatpush2.msra.mxu0 0.0
    %154 = vmatprep.subr.mxu0 0.0
    %155 = vmatpush2.msra.mxu0 0.0
    %156 = vmatprep.subr.mxu0 0.0
    %157 = vmatpush2.msra.mxu0 0.0
    %158 = vmatprep.subr.mxu0 0.0
    %159 = vmatpush2.msra.mxu0 0.0
    %160 = vmatprep.subr.mxu0 0.0
    %161 = vmatpush2.msra.mxu0 0.0
    %162 = vmatprep.subr.mxu0 0.0
    %163 = vmatpush2.msra.mxu0 0.0
    %164 = vmatprep.subr.mxu0 0.0
    %165 = vmatpush2.msra.mxu0 0.0
    %166 = vmatprep.mubr.f32.mxu0 0.0
    %167 = vmatmul.mubr.f32.gmra.mxu0 %v55
    %v168 = vpop.f32.mrf.mxu0
    %v169 = vadd.f32 0.0, %v168
    %v170 = vpop.f32.mrf.mxu0
    %171 = vmatprep.mubr.f32.mxu0 0.0
    %172 = vmatmul.mubr.f32.gmra.mxu0 %v58
    %v173 = vpop.f32.mrf.mxu0
    %v174 = vadd.f32 0.0, %v173
    %v175 = vpop.f32.mrf.mxu0
    %176 = vmatprep.mubr.f32.mxu0 0.0
    %177 = vmatmul.mubr.f32.gmra.mxu0 %v61
    %v178 = vpop.f32.mrf.mxu0
    %v179 = vadd.f32 0.0, %v178
    %v180 = vpop.f32.mrf.mxu0
    %181 = vmatprep.mubr.f32.mxu0 0.0
    %182 = vmatmul.mubr.f32.gmra.mxu0 %v64
    %v183 = vpop.f32.mrf.mxu0
    %v184 = vadd.f32 0.0, %v183
    %v185 = vpop.f32.mrf.mxu0
    %186 = vmatprep.mubr.f32.mxu0 0.0
    %187 = vmatmul.mubr.f32.gmra.mxu0 %v67
    %v188 = vpop.f32.mrf.mxu0
    %v189 = vadd.f32 0.0, %v188
    %v190 = vpop.f32.mrf.mxu0
    %191 = vmatprep.mubr.f32.mxu0 0.0
    %192 = vmatmul.mubr.f32.gmra.mxu0 %v70
    %v193 = vpop.f32.mrf.mxu0
    %v194 = vadd.f32 0.0, %v193
    %v195 = vpop.f32.mrf.mxu0
    %196 = vmatprep.mubr.f32.mxu0 0.0
    %197 = vmatmul.mubr.f32.gmra.mxu0 %v73
    %v198 = vpop.f32.mrf.mxu0
    %v199 = vadd.f32 0.0, %v198
    %v200 = vpop.f32.mrf.mxu0
    %201 = vmatprep.mubr.f32.mxu0 0.0
    %202 = vmatmul.mubr.f32.gmra.mxu0 %v76
    %v203 = vpop.f32.mrf.mxu0
    %v204 = vadd.f32 0.0, %v203
    %v205 = vpop.f32.mrf.mxu0
    %206 = vmatprep.mubr.f32.mxu0 0.0
    %207 = vmatmul.mubr.f32.gmra.mxu0 %v79
    %v208 = vpop.f32.mrf.mxu0
    %v209 = vadd.f32 0.0, %v208
    %v210 = vpop.f32.mrf.mxu0
    %211 = vmatprep.mubr.f32.mxu0 0.0
    %212 = vmatmul.mubr.f32.gmra.mxu0 %v82
    %v213 = vpop.f32.mrf.mxu0
    %v214 = vadd.f32 0.0, %v213
    %v215 = vpop.f32.mrf.mxu0
    %216 = vmatprep.mubr.f32.mxu0 0.0
    %217 = vmatmul.mubr.f32.gmra.mxu0 %v85
    %v218 = vpop.f32.mrf.mxu0
    %v219 = vadd.f32 0.0, %v218
    %v220 = vpop.f32.mrf.mxu0
    %221 = vmatprep.mubr.f32.mxu0 0.0
    %222 = vmatmul.mubr.f32.gmra.mxu0 %v88
    %v223 = vpop.f32.mrf.mxu0
    %v224 = vadd.f32 0.0, %v223
    %v225 = vpop.f32.mrf.mxu0
    %226 = vmatprep.mubr.f32.mxu0 0.0
    %227 = vmatmul.mubr.f32.gmra.mxu0 %v91
    %v228 = vpop.f32.mrf.mxu0
    %v229 = vadd.f32 0.0, %v228
    %v230 = vpop.f32.mrf.mxu0
    %231 = vmatprep.mubr.f32.mxu0 0.0
    %232 = vmatmul.mubr.f32.gmra.mxu0 %v94
    %v233 = vpop.f32.mrf.mxu0
    %v234 = vadd.f32 0.0, %v233
    %v235 = vpop.f32.mrf.mxu0
    %236 = vmatprep.mubr.f32.mxu0 0.0
    %237 = vmatmul.mubr.f32.gmra.mxu0 %v97
    %v238 = vpop.f32.mrf.mxu0
    %v239 = vadd.f32 0.0, %v238
    %v240 = vpop.f32.mrf.mxu0
    %241 = vmatprep.mubr.f32.mxu0 0.0
    %242 = vmatmul.mubr.f32.gmra.mxu0 %v100
    %v243 = vpop.f32.mrf.mxu0
    %v244 = vadd.f32 0.0, %v243
    %v245 = vpop.f32.mrf.mxu0
    %246 = vdwg.mxu0
    %v247 = vld [vmem:[%s2] sm:$0xff]
    %v248 = vld [vmem:[%s2 + $0x8] sm:$0xff]
    %v249 = vld [vmem:[%s2 + $0x10] sm:$0xff]
    %v250 = vld [vmem:[%s2 + $0x18] sm:$0xff]
    %v251 = vld [vmem:[%s2 + $0x20] sm:$0xff]
    %v252 = vld [vmem:[%s2 + $0x28] sm:$0xff]
    %v253 = vld [vmem:[%s2 + $0x30] sm:$0xff]
    %v254 = vld [vmem:[%s2 + $0x38] sm:$0xff]
    %v255 = vld [vmem:[%s2 + $0x40] sm:$0xff]
    %v256 = vld [vmem:[%s2 + $0x48] sm:$0xff]
    %v257 = vld [vmem:[%s2 + $0x50] sm:$0xff]
    %v258 = vld [vmem:[%s2 + $0x58] sm:$0xff]
    %v259 = vld [vmem:[%s2 + $0x60] sm:$0xff]
    %v260 = vld [vmem:[%s2 + $0x68] sm:$0xff]
    %v261 = vld [vmem:[%s2 + $0x70] sm:$0xff]
    %v262 = vld [vmem:[%s2 + $0x78] sm:$0xff]
    %263 = vmatprep.subr.mxu0 0.0
    %264 = vmatpush1.msra.mxu0 %v244
    %265 = vmatprep.subr.mxu0 0.0
    %266 = vmatpush1.msra.mxu0 %v239
    %267 = vmatprep.subr.mxu0 0.0
    %268 = vmatpush1.msra.mxu0 %v234
    %269 = vmatprep.subr.mxu0 0.0
    %270 = vmatpush1.msra.mxu0 %v229
    %271 = vmatprep.subr.mxu0 0.0
    %272 = vmatpush1.msra.mxu0 %v224
    %273 = vmatprep.subr.mxu0 0.0
    %274 = vmatpush1.msra.mxu0 %v219
    %275 = vmatprep.subr.mxu0 0.0
    %276 = vmatpush1.msra.mxu0 %v214
    %277 = vmatprep.subr.mxu0 0.0
    %278 = vmatpush1.msra.mxu0 %v209
    %279 = vmatprep.subr.mxu0 0.0
    %280 = vmatpush1.msra.mxu0 %v204
    %281 = vmatprep.subr.mxu0 0.0
    %282 = vmatpush1.msra.mxu0 %v199
    %283 = vmatprep.subr.mxu0 0.0
    %284 = vmatpush1.msra.mxu0 %v194
    %285 = vmatprep.subr.mxu0 0.0
    %286 = vmatpush1.msra.mxu0 %v189
    %287 = vmatprep.subr.mxu0 0.0
    %288 = vmatpush1.msra.mxu0 %v184
    %289 = vmatprep.subr.mxu0 0.0
    %290 = vmatpush1.msra.mxu0 %v179
    %291 = vmatprep.subr.mxu0 0.0
    %292 = vmatpush1.msra.mxu0 %v174
    %293 = vmatprep.subr.mxu0 0.0
    %294 = vmatpush1.msra.mxu0 %v169
    %295 = vmatprep.subr.mxu0 0.0
    %296 = vmatpush2.msra.mxu0 0.0
    %297 = vmatprep.subr.mxu0 0.0
    %298 = vmatpush2.msra.mxu0 0.0
    %299 = vmatprep.subr.mxu0 0.0
    %300 = vmatpush2.msra.mxu0 0.0
    %301 = vmatprep.subr.mxu0 0.0
    %302 = vmatpush2.msra.mxu0 0.0
    %303 = vmatprep.subr.mxu0 0.0
    %304 = vmatpush2.msra.mxu0 0.0
    %305 = vmatprep.subr.mxu0 0.0
    %306 = vmatpush2.msra.mxu0 0.0
    %307 = vmatprep.subr.mxu0 0.0
    %308 = vmatpush2.msra.mxu0 0.0
    %309 = vmatprep.subr.mxu0 0.0
    %310 = vmatpush2.msra.mxu0 0.0
    %311 = vmatprep.subr.mxu0 0.0
    %312 = vmatpush2.msra.mxu0 0.0
    %313 = vmatprep.subr.mxu0 0.0
    %314 = vmatpush2.msra.mxu0 0.0
    %315 = vmatprep.subr.mxu0 0.0
    %316 = vmatpush2.msra.mxu0 0.0
    %317 = vmatprep.subr.mxu0 0.0
    %318 = vmatpush2.msra.mxu0 0.0
    %319 = vmatprep.subr.mxu0 0.0
    %320 = vmatpush2.msra.mxu0 0.0
    %321 = vmatprep.subr.mxu0 0.0
    %322 = vmatpush2.msra.mxu0 0.0
    %323 = vmatprep.subr.mxu0 0.0
    %324 = vmatpush2.msra.mxu0 0.0
    %325 = vmatprep.subr.mxu0 0.0
    %326 = vmatpush2.msra.mxu0 0.0
    %327 = vmatprep.mubr.f32.mxu0 0.0
    %328 = vmatmul.mubr.f32.gmra.mxu0 %v247
    %v329 = vpop.f32.mrf.mxu0
    %v330 = vadd.f32 0.0, %v329
    %v331 = vpop.f32.mrf.mxu0
    %332 = vmatprep.mubr.f32.mxu0 0.0
    %333 = vmatmul.mubr.f32.gmra.mxu0 %v248
    %v334 = vpop.f32.mrf.mxu0
    %v335 = vadd.f32 0.0, %v334
    %v336 = vpop.f32.mrf.mxu0
    %337 = vmatprep.mubr.f32.mxu0 0.0
    %338 = vmatmul.mubr.f32.gmra.mxu0 %v249
    %v339 = vpop.f32.mrf.mxu0
    %v340 = vadd.f32 0.0, %v339
    %v341 = vpop.f32.mrf.mxu0
    %342 = vmatprep.mubr.f32.mxu0 0.0
    %343 = vmatmul.mubr.f32.gmra.mxu0 %v250
    %v344 = vpop.f32.mrf.mxu0
    %v345 = vadd.f32 0.0, %v344
    %v346 = vpop.f32.mrf.mxu0
    %347 = vmatprep.mubr.f32.mxu0 0.0
    %348 = vmatmul.mubr.f32.gmra.mxu0 %v251
    %v349 = vpop.f32.mrf.mxu0
    %v350 = vadd.f32 0.0, %v349
    %v351 = vpop.f32.mrf.mxu0
    %352 = vmatprep.mubr.f32.mxu0 0.0
    %353 = vmatmul.mubr.f32.gmra.mxu0 %v252
    %v354 = vpop.f32.mrf.mxu0
    %v355 = vadd.f32 0.0, %v354
    %v356 = vpop.f32.mrf.mxu0
    %357 = vmatprep.mubr.f32.mxu0 0.0
    %358 = vmatmul.mubr.f32.gmra.mxu0 %v253
    %v359 = vpop.f32.mrf.mxu0
    %v360 = vadd.f32 0.0, %v359
    %v361 = vpop.f32.mrf.mxu0
    %362 = vmatprep.mubr.f32.mxu0 0.0
    %363 = vmatmul.mubr.f32.gmra.mxu0 %v254
    %v364 = vpop.f32.mrf.mxu0
    %v365 = vadd.f32 0.0, %v364
    %v366 = vpop.f32.mrf.mxu0
    %367 = vmatprep.mubr.f32.mxu0 0.0
    %368 = vmatmul.mubr.f32.gmra.mxu0 %v255
    %v369 = vpop.f32.mrf.mxu0
    %v370 = vadd.f32 0.0, %v369
    %v371 = vpop.f32.mrf.mxu0
    %372 = vmatprep.mubr.f32.mxu0 0.0
    %373 = vmatmul.mubr.f32.gmra.mxu0 %v256
    %v374 = vpop.f32.mrf.mxu0
    %v375 = vadd.f32 0.0, %v374
    %v376 = vpop.f32.mrf.mxu0
    %377 = vmatprep.mubr.f32.mxu0 0.0
    %378 = vmatmul.mubr.f32.gmra.mxu0 %v257
    %v379 = vpop.f32.mrf.mxu0
    %v380 = vadd.f32 0.0, %v379
    %v381 = vpop.f32.mrf.mxu0
    %382 = vmatprep.mubr.f32.mxu0 0.0
    %383 = vmatmul.mubr.f32.gmra.mxu0 %v258
    %v384 = vpop.f32.mrf.mxu0
    %v385 = vadd.f32 0.0, %v384
    %v386 = vpop.f32.mrf.mxu0
    %387 = vmatprep.mubr.f32.mxu0 0.0
    %388 = vmatmul.mubr.f32.gmra.mxu0 %v259
    %v389 = vpop.f32.mrf.mxu0
    %v390 = vadd.f32 0.0, %v389
    %v391 = vpop.f32.mrf.mxu0
    %392 = vmatprep.mubr.f32.mxu0 0.0
    %393 = vmatmul.mubr.f32.gmra.mxu0 %v260
    %v394 = vpop.f32.mrf.mxu0
    %v395 = vadd.f32 0.0, %v394
    %v396 = vpop.f32.mrf.mxu0
    %397 = vmatprep.mubr.f32.mxu0 0.0
    %398 = vmatmul.mubr.f32.gmra.mxu0 %v261
    %v399 = vpop.f32.mrf.mxu0
    %v400 = vadd.f32 0.0, %v399
    %v401 = vpop.f32.mrf.mxu0
    %402 = vmatprep.mubr.f32.mxu0 0.0
    %403 = vmatmul.mubr.f32.gmra.mxu0 %v262
    %v404 = vpop.f32.mrf.mxu0
    %v405 = vadd.f32 0.0, %v404
    %v406 = vpop.f32.mrf.mxu0
    %407 = vdwg.mxu0
    %v408 = vld [vmem:[%s3] sm:$0xff]
    %v409 = vld [vmem:[%s3 + $0x8] sm:$0xff]
    %v410 = vld [vmem:[%s3 + $0x10] sm:$0xff]
    %v411 = vld [vmem:[%s3 + $0x18] sm:$0xff]
    %v412 = vld [vmem:[%s3 + $0x20] sm:$0xff]
    %v413 = vld [vmem:[%s3 + $0x28] sm:$0xff]
    %v414 = vld [vmem:[%s3 + $0x30] sm:$0xff]
    %v415 = vld [vmem:[%s3 + $0x38] sm:$0xff]
    %v416 = vld [vmem:[%s3 + $0x40] sm:$0xff]
    %v417 = vld [vmem:[%s3 + $0x48] sm:$0xff]
    %v418 = vld [vmem:[%s3 + $0x50] sm:$0xff]
    %v419 = vld [vmem:[%s3 + $0x58] sm:$0xff]
    %v420 = vld [vmem:[%s3 + $0x60] sm:$0xff]
    %v421 = vld [vmem:[%s3 + $0x68] sm:$0xff]
    %v422 = vld [vmem:[%s3 + $0x70] sm:$0xff]
    %v423 = vld [vmem:[%s3 + $0x78] sm:$0xff]
    %425 = vset.pattern.permute.xlu0 0
    %426 = vperm.xlu0 %425, %v408
    %v427 = vpop.permute.xlu0 %426
    %430 = vset.pattern.permute.xlu0 0
    %431 = vperm.xlu0 %430, %v409
    %v432 = vpop.permute.xlu0 %431
    %435 = vset.pattern.permute.xlu0 0
    %436 = vperm.xlu0 %435, %v410
    %v437 = vpop.permute.xlu0 %436
    %440 = vset.pattern.permute.xlu0 0
    %441 = vperm.xlu0 %440, %v411
    %v442 = vpop.permute.xlu0 %441
    %445 = vset.pattern.permute.xlu0 0
    %446 = vperm.xlu0 %445, %v412
    %v447 = vpop.permute.xlu0 %446
    %450 = vset.pattern.permute.xlu0 0
    %451 = vperm.xlu0 %450, %v413
    %v452 = vpop.permute.xlu0 %451
    %455 = vset.pattern.permute.xlu0 0
    %456 = vperm.xlu0 %455, %v414
    %v457 = vpop.permute.xlu0 %456
    %460 = vset.pattern.permute.xlu0 0
    %461 = vperm.xlu0 %460, %v415
    %v462 = vpop.permute.xlu0 %461
    %465 = vset.pattern.permute.xlu0 0
    %466 = vperm.xlu0 %465, %v416
    %v467 = vpop.permute.xlu0 %466
    %470 = vset.pattern.permute.xlu0 0
    %471 = vperm.xlu0 %470, %v417
    %v472 = vpop.permute.xlu0 %471
    %475 = vset.pattern.permute.xlu0 0
    %476 = vperm.xlu0 %475, %v418
    %v477 = vpop.permute.xlu0 %476
    %480 = vset.pattern.permute.xlu0 0
    %481 = vperm.xlu0 %480, %v419
    %v482 = vpop.permute.xlu0 %481
    %485 = vset.pattern.permute.xlu0 0
    %486 = vperm.xlu0 %485, %v420
    %v487 = vpop.permute.xlu0 %486
    %490 = vset.pattern.permute.xlu0 0
    %491 = vperm.xlu0 %490, %v421
    %v492 = vpop.permute.xlu0 %491
    %495 = vset.pattern.permute.xlu0 0
    %496 = vperm.xlu0 %495, %v422
    %v497 = vpop.permute.xlu0 %496
    %500 = vset.pattern.permute.xlu0 0
    %501 = vperm.xlu0 %500, %v423
    %v502 = vpop.permute.xlu0 %501
    %v504 = vmul.f32 %v427, %v330
    %v505 = vmul.f32 %v432, %v335
    %v506 = vmul.f32 %v437, %v340
    %v507 = vmul.f32 %v442, %v345
    %v508 = vmul.f32 %v447, %v350
    %v509 = vmul.f32 %v452, %v355
    %v510 = vmul.f32 %v457, %v360
    %v511 = vmul.f32 %v462, %v365
    %v512 = vmul.f32 %v467, %v370
    %v513 = vmul.f32 %v472, %v375
    %v514 = vmul.f32 %v477, %v380
    %v515 = vmul.f32 %v482, %v385
    %v516 = vmul.f32 %v487, %v390
    %v517 = vmul.f32 %v492, %v395
    %v518 = vmul.f32 %v497, %v400
    %v519 = vmul.f32 %v502, %v405
    %v520 = vld [vmem:[%s4] sm:$0xff]
    %v521 = vld [vmem:[%s4 + $0x8] sm:$0xff]
    %v522 = vld [vmem:[%s4 + $0x10] sm:$0xff]
    %v523 = vld [vmem:[%s4 + $0x18] sm:$0xff]
    %v524 = vld [vmem:[%s4 + $0x20] sm:$0xff]
    %v525 = vld [vmem:[%s4 + $0x28] sm:$0xff]
    %v526 = vld [vmem:[%s4 + $0x30] sm:$0xff]
    %v527 = vld [vmem:[%s4 + $0x38] sm:$0xff]
    %v528 = vld [vmem:[%s4 + $0x40] sm:$0xff]
    %v529 = vld [vmem:[%s4 + $0x48] sm:$0xff]
    %v530 = vld [vmem:[%s4 + $0x50] sm:$0xff]
    %v531 = vld [vmem:[%s4 + $0x58] sm:$0xff]
    %v532 = vld [vmem:[%s4 + $0x60] sm:$0xff]
    %v533 = vld [vmem:[%s4 + $0x68] sm:$0xff]
    %v534 = vld [vmem:[%s4 + $0x70] sm:$0xff]
    %v535 = vld [vmem:[%s4 + $0x78] sm:$0xff]
    %537 = vset.pattern.permute.xlu0 0
    %538 = vperm.xlu0 %537, %v520
    %v539 = vpop.permute.xlu0 %538
    %542 = vset.pattern.permute.xlu0 0
    %543 = vperm.xlu0 %542, %v521
    %v544 = vpop.permute.xlu0 %543
    %547 = vset.pattern.permute.xlu0 0
    %548 = vperm.xlu0 %547, %v522
    %v549 = vpop.permute.xlu0 %548
    %552 = vset.pattern.permute.xlu0 0
    %553 = vperm.xlu0 %552, %v523
    %v554 = vpop.permute.xlu0 %553
    %557 = vset.pattern.permute.xlu0 0
    %558 = vperm.xlu0 %557, %v524
    %v559 = vpop.permute.xlu0 %558
    %562 = vset.pattern.permute.xlu0 0
    %563 = vperm.xlu0 %562, %v525
    %v564 = vpop.permute.xlu0 %563
    %567 = vset.pattern.permute.xlu0 0
    %568 = vperm.xlu0 %567, %v526
    %v569 = vpop.permute.xlu0 %568
    %572 = vset.pattern.permute.xlu0 0
    %573 = vperm.xlu0 %572, %v527
    %v574 = vpop.permute.xlu0 %573
    %577 = vset.pattern.permute.xlu0 0
    %578 = vperm.xlu0 %577, %v528
    %v579 = vpop.permute.xlu0 %578
    %582 = vset.pattern.permute.xlu0 0
    %583 = vperm.xlu0 %582, %v529
    %v584 = vpop.permute.xlu0 %583
    %587 = vset.pattern.permute.xlu0 0
    %588 = vperm.xlu0 %587, %v530
    %v589 = vpop.permute.xlu0 %588
    %592 = vset.pattern.permute.xlu0 0
    %593 = vperm.xlu0 %592, %v531
    %v594 = vpop.permute.xlu0 %593
    %597 = vset.pattern.permute.xlu0 0
    %598 = vperm.xlu0 %597, %v532
    %v599 = vpop.permute.xlu0 %598
    %602 = vset.pattern.permute.xlu0 0
    %603 = vperm.xlu0 %602, %v533
    %v604 = vpop.permute.xlu0 %603
    %607 = vset.pattern.permute.xlu0 0
    %608 = vperm.xlu0 %607, %v534
    %v609 = vpop.permute.xlu0 %608
    %612 = vset.pattern.permute.xlu0 0
    %613 = vperm.xlu0 %612, %v535
    %v614 = vpop.permute.xlu0 %613
    %v616 = vadd.f32 %v504, %v539
    %v617 = vadd.f32 %v505, %v544
    %v618 = vadd.f32 %v506, %v549
    %v619 = vadd.f32 %v507, %v554
    %v620 = vadd.f32 %v508, %v559
    %v621 = vadd.f32 %v509, %v564
    %v622 = vadd.f32 %v510, %v569
    %v623 = vadd.f32 %v511, %v574
    %v624 = vadd.f32 %v512, %v579
    %v625 = vadd.f32 %v513, %v584
    %v626 = vadd.f32 %v514, %v589
    %v627 = vadd.f32 %v515, %v594
    %v628 = vadd.f32 %v516, %v599
    %v629 = vadd.f32 %v517, %v604
    %v630 = vadd.f32 %v518, %v609
    %v631 = vadd.f32 %v519, %v614
    %v632 = vadd.f32 %v616, %v35
    %v633 = vadd.f32 %v617, %v36
    %v634 = vadd.f32 %v618, %v37
    %v635 = vadd.f32 %v619, %v38
    %v636 = vadd.f32 %v620, %v39
    %v637 = vadd.f32 %v621, %v40
    %v638 = vadd.f32 %v622, %v41
    %v639 = vadd.f32 %v623, %v42
    %v640 = vadd.f32 %v624, %v43
    %v641 = vadd.f32 %v625, %v44
    %v642 = vadd.f32 %v626, %v45
    %v643 = vadd.f32 %v627, %v46
    %v644 = vadd.f32 %v628, %v47
    %v645 = vadd.f32 %v629, %v48
    %v646 = vadd.f32 %v630, %v49
    %v647 = vadd.f32 %v631, %v50
    %v648 = vmax.f32 %v632, 0.0
    %v649 = vmax.f32 %v633, 0.0
    %v650 = vmax.f32 %v634, 0.0
    %v651 = vmax.f32 %v635, 0.0
    %v652 = vmax.f32 %v636, 0.0
    %v653 = vmax.f32 %v637, 0.0
    %v654 = vmax.f32 %v638, 0.0
    %v655 = vmax.f32 %v639, 0.0
    %v656 = vmax.f32 %v640, 0.0
    %v657 = vmax.f32 %v641, 0.0
    %v658 = vmax.f32 %v642, 0.0
    %v659 = vmax.f32 %v643, 0.0
    %v660 = vmax.f32 %v644, 0.0
    %v661 = vmax.f32 %v645, 0.0
    %v662 = vmax.f32 %v646, 0.0
    %v663 = vmax.f32 %v647, 0.0
    %664 = vst.msk [vmem:[#allocation5] sm:$0xff] %vm53, %v648
    %665 = vst.msk [vmem:[#allocation5 + $0x8] sm:$0xff] %vm53, %v649
    %666 = vst.msk [vmem:[#allocation5 + $0x10] sm:$0xff] %vm53, %v650
    %667 = vst.msk [vmem:[#allocation5 + $0x18] sm:$0xff] %vm53, %v651
    %668 = vst.msk [vmem:[#allocation5 + $0x20] sm:$0xff] %vm53, %v652
    %669 = vst.msk [vmem:[#allocation5 + $0x28] sm:$0xff] %vm53, %v653
    %670 = vst.msk [vmem:[#allocation5 + $0x30] sm:$0xff] %vm53, %v654
    %671 = vst.msk [vmem:[#allocation5 + $0x38] sm:$0xff] %vm53, %v655
    %672 = vst.msk [vmem:[#allocation5 + $0x40] sm:$0xff] %vm53, %v656
    %673 = vst.msk [vmem:[#allocation5 + $0x48] sm:$0xff] %vm53, %v657
    %674 = vst.msk [vmem:[#allocation5 + $0x50] sm:$0xff] %vm53, %v658
    %675 = vst.msk [vmem:[#allocation5 + $0x58] sm:$0xff] %vm53, %v659
    %676 = vst.msk [vmem:[#allocation5 + $0x60] sm:$0xff] %vm53, %v660
    %677 = vst.msk [vmem:[#allocation5 + $0x68] sm:$0xff] %vm53, %v661
    %678 = vst.msk [vmem:[#allocation5 + $0x70] sm:$0xff] %vm53, %v662
    %679 = vst.msk [vmem:[#allocation5 + $0x78] sm:$0xff] %vm53, %v663
    // Predicated region
    $region26: #{shuffle_plug_forward.1} parent=1 // pred_check
      _
    $region27: #{shuffle_plug_forward.1} parent=1 // pred_check_branch
      %681 = sbr.rel (0) target = $region29
    $region28: #{shuffle_plug_forward.1} parent=1 // pred_region
      %s683 = ssub.s32 2048, 2048
      %684 = vsyncadd [#allocation4], %s683
      %s685 = sshll.u32 [#allocation5], 4
      %s686 = int_to_ptr.vmem [resolvable:$true] %s685
      %691 = dma.vmem_to_hbm [thread:$0]  %s686, 2048, %s5, [#allocation4], 128, 128, 8
    $region29: #{shuffle_plug_forward.1} parent=1 // pred_fallthru
      _
    // Predicated region
    $region30: #{shuffle_plug_forward.1} parent=1 // pred_check
      _
    $region31: #{shuffle_plug_forward.1} parent=1 // pred_check_branch
      %693 = sbr.rel (0) target = $region33
    $region32: #{shuffle_plug_forward.1} parent=1 // pred_region
      %694 = dma.done [#allocation4], 2048
    $region33: #{shuffle_plug_forward.1} parent=1 // pred_fallthru
      _
    %695 = vsyncpa [#allocation3], 1
    %696 = vsyncpa [#allocation4], 1

</llo_original>
